<compile_context>
chip_gen: v7x
topology: tpu7x:2x2x1
jax: 0.10.0
libtpu: 0.0.40
codegen_flags: <defaults>
</compile_context>

<pallas_src>
import functools

import jax
import jax.numpy as jnp
from jax import lax
from jax.experimental import pallas as pl
from jax.experimental.pallas import tpu as pltpu


def _round_up(x, m):
    return (x + m - 1) // m * m


# ---------------------------------------------------------------------------
# Kernel helpers (shared by the labels-path and explicit-mask-path kernels)
# ---------------------------------------------------------------------------

def _init_scratch(m_sc, l_sc, pa_sc, pc_sc):
    m_sc[...] = jnp.full_like(m_sc, -1e30)
    l_sc[...] = jnp.zeros_like(l_sc)
    pa_sc[...] = jnp.zeros_like(pa_sc)
    pc_sc[...] = jnp.zeros_like(pc_sc)


def _online_update(adc, denom_mask, pos_w, m_sc, l_sc, pa_sc, pc_sc):
    """One online-LSE / positive-sum accumulation step over an [TA, TN] tile.

    adc        : [TA, TN] f32 logits (anchor . contrast / temperature)
    denom_mask : [TA, TN] bool, True for columns kept in the softmax denominator
    pos_w      : [TA, TN] f32 positive-pair weights (already 0 on excluded cols)
    """
    m_cur = m_sc[...]
    m_new = jnp.maximum(m_cur, jnp.max(adc, axis=1, keepdims=True))
    alpha = jnp.exp(m_cur - m_new)
    p = jnp.where(denom_mask, jnp.exp(adc - m_new), 0.0)
    l_sc[...] = alpha * l_sc[...] + jnp.sum(p, axis=1, keepdims=True)
    m_sc[...] = m_new
    pa_sc[...] += jnp.sum(pos_w * adc, axis=1, keepdims=True)
    pc_sc[...] += jnp.sum(pos_w, axis=1, keepdims=True)


def _finalize(loss_ref, m_sc, l_sc, pa_sc, pc_sc, loss_scale):
    lse = m_sc[...] + jnp.log(l_sc[...])
    mean_log_prob_pos = (pa_sc[...] - pc_sc[...] * lse) / pc_sc[...]
    loss_ref[...] = (loss_scale * mean_log_prob_pos).astype(loss_ref.dtype)


def _dot_and_masks(anchor_ref, contrast_t_ref, inv_temp, n_actual, mask_cols):
    # Fold 1/temperature into the small [TA, D] operand (cheaper than scaling the
    # [TA, TN] product); RHS is already [D, TN] so no in-kernel transpose.
    a = anchor_ref[...]
    a = (a.astype(jnp.float32) * inv_temp).astype(a.dtype)
    adc = jnp.dot(a, contrast_t_ref[...], preferred_element_type=jnp.float32)

    ta, tn = adc.shape
    g_row = pl.program_id(0) * ta + lax.broadcasted_iota(jnp.int32, (ta, tn), 0)
    g_col = pl.program_id(1) * tn + lax.broadcasted_iota(jnp.int32, (ta, tn), 1)
    denom_mask = g_row != g_col                 # drop self-contrast term
    if mask_cols:                               # drop zero-padded contrast columns
        denom_mask = jnp.logical_and(denom_mask, g_col < n_actual)
    return adc, denom_mask


# ---------------------------------------------------------------------------
# Kernel bodies
# ---------------------------------------------------------------------------

def _supcon_labels_kernel(row_lab_ref, col_lab_ref, anchor_ref, contrast_t_ref,
                          loss_ref, m_sc, l_sc, pa_sc, pc_sc, *,
                          inv_temp, loss_scale, n_actual, mask_cols):
    n_idx = pl.program_id(1)

    @pl.when(n_idx == 0)
    def _():
        _init_scratch(m_sc, l_sc, pa_sc, pc_sc)

    adc, denom_mask = _dot_and_masks(anchor_ref, contrast_t_ref,
                                     inv_temp, n_actual, mask_cols)
    # Positive-pair mask rebuilt per tile from label vectors (no A x N input).
    pos_w = jnp.logical_and(row_lab_ref[...] == col_lab_ref[...],
                            denom_mask).astype(jnp.float32)

    _online_update(adc, denom_mask, pos_w, m_sc, l_sc, pa_sc, pc_sc)

    @pl.when(n_idx == pl.num_programs(1) - 1)
    def _():
        _finalize(loss_ref, m_sc, l_sc, pa_sc, pc_sc, loss_scale)


def _supcon_mask_kernel(anchor_ref, contrast_t_ref, posmask_ref,
                        loss_ref, m_sc, l_sc, pa_sc, pc_sc, *,
                        inv_temp, loss_scale, n_actual, mask_cols):
    n_idx = pl.program_id(1)

    @pl.when(n_idx == 0)
    def _():
        _init_scratch(m_sc, l_sc, pa_sc, pc_sc)

    adc, denom_mask = _dot_and_masks(anchor_ref, contrast_t_ref,
                                     inv_temp, n_actual, mask_cols)
    # Keep the float weights exactly as PyTorch does (mask may be asymmetric /
    # non-binary); the self-contrast / padded columns are still zeroed.
    pos_w = posmask_ref[...].astype(jnp.float32) * denom_mask.astype(jnp.float32)

    _online_update(adc, denom_mask, pos_w, m_sc, l_sc, pa_sc, pc_sc)

    @pl.when(n_idx == pl.num_programs(1) - 1)
    def _():
        _finalize(loss_ref, m_sc, l_sc, pa_sc, pc_sc, loss_scale)


# ---------------------------------------------------------------------------
# Wrapper
# ---------------------------------------------------------------------------

def supcon_loss(features, labels=None, mask=None, *, temperature=0.07,
                contrast_mode='all', base_temperature=0.07,
                matmul_dtype=jnp.float32, block_a=256, block_n=512):
    """JAX/Pallas port of SupConLoss.forward (same semantics as the PyTorch module)."""
    if features.ndim < 3:
        raise ValueError('`features` needs to be [bsz, n_views, ...]')
    assert block_a % 8 == 0 and block_n % 128 == 0

    bsz, n_views = features.shape[0], features.shape[1]
    feats = features.reshape(bsz, n_views, -1)
    D = feats.shape[-1]

    if labels is not None and mask is not None:
        raise ValueError('Cannot define both `labels` and `mask`')

    contrast_count = n_views
    # torch.cat(torch.unbind(features, dim=1), dim=0) -> [n_views*bsz, D]
    contrast_feature = jnp.transpose(feats, (1, 0, 2)).reshape(n_views * bsz, D)

    if contrast_mode == 'one':
        anchor_feature, anchor_count = feats[:, 0], 1
    elif contrast_mode == 'all':
        anchor_feature, anchor_count = contrast_feature, contrast_count
    else:
        raise ValueError('Unknown mode: {}'.format(contrast_mode))

    A = anchor_count * bsz
    N = contrast_count * bsz

    # Tile sizes: full dims for small problems (always legal), otherwise
    # (8,128)-aligned tiles sized to stay well inside the v7x 32 MiB scoped VMEM.
    TA = A if A <= block_a else block_a
    TN = N if N <= block_n else block_n
    A_pad, N_pad, Dp = _round_up(A, TA), _round_up(N, TN), _round_up(D, 128)
    pad_A, pad_N, pad_D = A_pad - A, N_pad - N, Dp - D
    GA, GN = A_pad // TA, N_pad // TN

    # Zero-pad feature dim to a lane/MXU-friendly multiple of 128; pre-transpose
    # the contrast slab to [D, N] so the kernel never transposes.
    anchor_p = jnp.pad(anchor_feature, ((0, pad_A), (0, pad_D))).astype(matmul_dtype)
    contrast_t = jnp.transpose(
        jnp.pad(contrast_feature, ((0, pad_N), (0, pad_D))).astype(matmul_dtype))

    inv_temp = 1.0 / float(temperature)
    loss_scale = -(float(temperature) / float(base_temperature))

    def _run(kernel, in_specs, operands):
        return pl.pallas_call(
            kernel,
            out_shape=jax.ShapeDtypeStruct((A_pad, 1), jnp.float32),
            grid_spec=pltpu.PrefetchScalarGridSpec(
                num_scalar_prefetch=0,
                grid=(GA, GN),
                in_specs=in_specs,
                out_specs=pl.BlockSpec((TA, 1), lambda a, n: (a, 0)),
                scratch_shapes=[pltpu.VMEM((TA, 1), jnp.float32)] * 4),
            compiler_params=pltpu.CompilerParams(
                dimension_semantics=("parallel", "arbitrary"),
                vmem_limit_bytes=32 * 1024 * 1024),
        )(*operands)

    if mask is None:
        if labels is None:
            lab = jnp.arange(bsz, dtype=jnp.int32)          # eye(bsz) == label i = i
        else:
            lab = jnp.asarray(labels).reshape(-1).astype(jnp.int32)
            if lab.shape[0] != bsz:
                raise ValueError('Num of labels does not match num of features')
        col_lab = jnp.tile(lab, (contrast_count,))           # [N]
        row_lab = lab if anchor_count == 1 else col_lab      # [A]
        row_lab2 = jnp.pad(row_lab, (0, pad_A)).reshape(A_pad, 1)
        col_lab2 = jnp.pad(col_lab, (0, pad_N)).reshape(1, N_pad)

        kernel = functools.partial(
            _supcon_labels_kernel, inv_temp=inv_temp, loss_scale=loss_scale,
            n_actual=N, mask_cols=(pad_N > 0))
        in_specs = [
            pl.BlockSpec((TA, 1), lambda a, n: (a, 0)),      # row labels
            pl.BlockSpec((1, TN), lambda a, n: (0, n)),      # col labels
            pl.BlockSpec((TA, Dp), lambda a, n: (a, 0)),     # anchor tile
            pl.BlockSpec((Dp, TN), lambda a, n: (0, n)),     # contrast^T tile
        ]
        per_anchor = _run(kernel, in_specs, (row_lab2, col_lab2, anchor_p, contrast_t))
    else:
        # TODO(synk): explicit `mask` path still materializes the tiled A x N mask
        # (f32 to preserve PyTorch's weighted-mask semantics). Prefer `labels`.
        base_mask = jnp.asarray(mask).astype(jnp.float32)
        tiled = jnp.pad(jnp.tile(base_mask, (anchor_count, contrast_count)),
                        ((0, pad_A), (0, pad_N)))
        kernel = functools.partial(
            _supcon_mask_kernel, inv_temp=inv_temp, loss_scale=loss_scale,
            n_actual=N, mask_cols=(pad_N > 0))
        in_specs = [
            pl.BlockSpec((TA, Dp), lambda a, n: (a, 0)),
            pl.BlockSpec((Dp, TN), lambda a, n: (0, n)),
            pl.BlockSpec((TA, TN), lambda a, n: (a, n)),
        ]
        per_anchor = _run(kernel, in_specs, (anchor_p, contrast_t, tiled))

    # loss.view(anchor_count, batch_size).mean() == mean over all A anchors.
    return jnp.mean(per_anchor[:A, 0])


# ---------------------------------------------------------------------------
# Pure-JAX reference for correctness checking
# ---------------------------------------------------------------------------

def _supcon_loss_ref(features, labels=None, *, temperature=0.07,
                     contrast_mode='all', base_temperature=0.07):
    bsz, n_views = features.shape[0], features.shape[1]
    feats = features.reshape(bsz, n_views, -1)
    if labels is None:
        base_mask = jnp.eye(bsz, dtype=jnp.float32)
    else:
        labels = labels.reshape(-1, 1)
        base_mask = (labels == labels.T).astype(jnp.float32)
    contrast_feature = jnp.transpose(feats, (1, 0, 2)).reshape(n_views * bsz, -1)
    if contrast_mode == 'one':
        anchor_feature, anchor_count = feats[:, 0], 1
    else:
        anchor_feature, anchor_count = contrast_feature, n_views
    adc = jnp.matmul(anchor_feature, contrast_feature.T,
                     precision=lax.Precision.HIGHEST) / temperature
    logits = adc - jnp.max(adc, axis=1, keepdims=True)
    m = jnp.tile(base_mask, (anchor_count, n_views))
    Aa, Nn = m.shape
    logits_mask = 1.0 - jnp.eye(Aa, Nn, dtype=jnp.float32)
    m = m * logits_mask
    exp_logits = jnp.exp(logits) * logits_mask
    log_prob = logits - jnp.log(jnp.sum(exp_logits, axis=1, keepdims=True))
    mean_log_prob_pos = jnp.sum(m * log_prob, axis=1) / jnp.sum(m, axis=1)
    return jnp.mean(-(temperature / base_temperature) * mean_log_prob_pos)


if __name__ == "__main__":
    key = jax.random.PRNGKey(0)
    k1, k2, k3, k4 = jax.random.split(key, 4)

    # Small case (single tile per axis).
    bsz, n_views, dim = 8, 2, 32
    feats = jax.random.normal(k1, (bsz, n_views, dim), dtype=jnp.float32)
    feats = feats / jnp.linalg.norm(feats, axis=-1, keepdims=True)
    labels = jax.random.randint(k2, (bsz,), 0, 3)
    mask_f = (labels[:, None] == labels[None, :]).astype(jnp.float32)

    loss_unsup = supcon_loss(feats)                                    # SimCLR path
    loss_sup = supcon_loss(feats, labels=labels)                       # labels path
    loss_one = supcon_loss(feats, labels=labels, contrast_mode='one')  # 'one' mode
    loss_mask = supcon_loss(feats, mask=mask_f)                        # explicit mask path
    loss_bf16 = supcon_loss(feats, labels=labels, matmul_dtype=jnp.bfloat16)

    # Larger case exercising the multi-tile grid, online LSE and column padding.
    bsz2, nv2, dim2 = 80, 2, 32
    feats2 = jax.random.normal(k3, (bsz2, nv2, dim2), dtype=jnp.float32)
    feats2 = feats2 / jnp.linalg.norm(feats2, axis=-1, keepdims=True)
    labels2 = jax.random.randint(k4, (bsz2,), 0, 5)
    loss_tiled = supcon_loss(feats2, labels=labels2, block_a=64, block_n=128)

    jax.block_until_ready((loss_unsup, loss_sup, loss_one, loss_mask,
                           loss_bf16, loss_tiled))

    ref_unsup = _supcon_loss_ref(feats)
    ref_sup = _supcon_loss_ref(feats, labels)
    ref_one = _supcon_loss_ref(feats, labels, contrast_mode='one')
    ref_tiled = _supcon_loss_ref(feats2, labels2)

    assert jnp.allclose(loss_unsup, ref_unsup, rtol=1e-3, atol=1e-3), (loss_unsup, ref_unsup)
    assert jnp.allclose(loss_sup, ref_sup, rtol=1e-3, atol=1e-3), (loss_sup, ref_sup)
    assert jnp.allclose(loss_one, ref_one, rtol=1e-3, atol=1e-3), (loss_one, ref_one)
    assert jnp.allclose(loss_mask, ref_sup, rtol=1e-3, atol=1e-3), (loss_mask, ref_sup)
    assert jnp.allclose(loss_bf16, ref_sup, rtol=1e-1, atol=1e-1), (loss_bf16, ref_sup)
    assert jnp.allclose(loss_tiled, ref_tiled, rtol=1e-3, atol=1e-3), (loss_tiled, ref_tiled)

    print("KERNEL_OK")
</pallas_src>

<mosaic_0001>
module attributes {stable_mosaic.version = 11 : i64} {
  func.func @_supcon_labels_kernel(%arg0: i32, %arg1: i32, %arg2: memref<16x1xi32, #tpu.memory_space<vmem>>, %arg3: memref<1x16xi32, #tpu.memory_space<vmem>>, %arg4: memref<16x128xf32, #tpu.memory_space<vmem>>, %arg5: memref<128x16xf32, #tpu.memory_space<vmem>>, %arg6: memref<16x1xf32, #tpu.memory_space<vmem>>, %arg7: memref<16x1xf32, #tpu.memory_space<vmem>>, %arg8: memref<16x1xf32, #tpu.memory_space<vmem>>, %arg9: memref<16x1xf32, #tpu.memory_space<vmem>>, %arg10: memref<16x1xf32, #tpu.memory_space<vmem>>) attributes {dimension_semantics = [#tpu.dimension_semantics<parallel>, #tpu.dimension_semantics<arbitrary>], iteration_bounds = array<i64: 1, 1>, scalar_prefetch = 0 : i64, scratch_operands = 4 : i64, tpu.core_type = #tpu.core_type<tc>, window_params = [{transform_indices = @transform_0, window_bounds = array<i64: 16, 1>}, {transform_indices = @transform_1, window_bounds = array<i64: 1, 16>}, {transform_indices = @transform_2, window_bounds = array<i64: 16, 128>}, {transform_indices = @transform_3, window_bounds = array<i64: 128, 16>}, {transform_indices = @transform_4, window_bounds = array<i64: 16, 1>}]} {
    %c0_i32 = arith.constant 0 : i32
    %0 = arith.cmpi eq, %arg1, %c0_i32 : i32
    %1 = arith.extui %0 : i1 to i32
    %c0_i32_0 = arith.constant 0 : i32
    %2 = arith.cmpi ne, %1, %c0_i32_0 : i32
    scf.if %2 {
      %cst_33 = arith.constant -1.000000e+30 : f32
      %57 = vector.broadcast %cst_33 : f32 to vector<16x1xf32>
      %c0_34 = arith.constant 0 : index
      %c0_35 = arith.constant 0 : index
      %58 = vector.load %arg7[%c0_34, %c0_35] : memref<16x1xf32, #tpu.memory_space<vmem>>, vector<16x1xf32>
      tpu.vector_store %arg7[%c0_34, %c0_35], %57 {strides = array<i32>} : memref<16x1xf32, #tpu.memory_space<vmem>>, vector<16x1xf32>,
      %cst_36 = arith.constant 0.000000e+00 : f32
      %59 = vector.broadcast %cst_36 : f32 to vector<16x1xf32>
      %c0_37 = arith.constant 0 : index
      %c0_38 = arith.constant 0 : index
      %60 = vector.load %arg8[%c0_37, %c0_38] : memref<16x1xf32, #tpu.memory_space<vmem>>, vector<16x1xf32>
      tpu.vector_store %arg8[%c0_37, %c0_38], %59 {strides = array<i32>} : memref<16x1xf32, #tpu.memory_space<vmem>>, vector<16x1xf32>,
      %cst_39 = arith.constant 0.000000e+00 : f32
      %61 = vector.broadcast %cst_39 : f32 to vector<16x1xf32>
      %c0_40 = arith.constant 0 : index
      %c0_41 = arith.constant 0 : index
      %62 = vector.load %arg9[%c0_40, %c0_41] : memref<16x1xf32, #tpu.memory_space<vmem>>, vector<16x1xf32>
      tpu.vector_store %arg9[%c0_40, %c0_41], %61 {strides = array<i32>} : memref<16x1xf32, #tpu.memory_space<vmem>>, vector<16x1xf32>,
      %cst_42 = arith.constant 0.000000e+00 : f32
      %63 = vector.broadcast %cst_42 : f32 to vector<16x1xf32>
      %c0_43 = arith.constant 0 : index
      %c0_44 = arith.constant 0 : index
      %64 = vector.load %arg10[%c0_43, %c0_44] : memref<16x1xf32, #tpu.memory_space<vmem>>, vector<16x1xf32>
      tpu.vector_store %arg10[%c0_43, %c0_44], %63 {strides = array<i32>} : memref<16x1xf32, #tpu.memory_space<vmem>>, vector<16x1xf32>,
    } else {
    }
    %c0 = arith.constant 0 : index
    %c0_1 = arith.constant 0 : index
    %3 = vector.load %arg4[%c0, %c0_1] : memref<16x128xf32, #tpu.memory_space<vmem>>, vector<16x128xf32>
    %cst = arith.constant 14.2857141 : f32
    %4 = vector.broadcast %cst : f32 to vector<16x128xf32>
    %5 = arith.mulf %3, %4 : vector<16x128xf32>
    %c0_2 = arith.constant 0 : index
    %c0_3 = arith.constant 0 : index
    %6 = vector.load %arg5[%c0_2, %c0_3] : memref<128x16xf32, #tpu.memory_space<vmem>>, vector<128x16xf32>
    %cst_4 = arith.constant dense<0.000000e+00> : vector<16x16xf32>
    %7 = tpu.matmul %5, %6, %cst_4 {dimension_numbers = #tpu.dot_dimension_numbers<[1], [0], [0], [1], [0, 0, 1, 1], [], []>} : vector<16x128xf32>, vector<128x16xf32>, vector<16x16xf32> -> vector<16x16xf32>
    %c16_i32 = arith.constant 16 : i32
    %8 = arith.muli %arg0, %c16_i32 : i32
    %9 = tpu.iota {dimensions = array<i32: 0>} : vector<16x16xi32>
    %10 = vector.broadcast %8 : i32 to vector<16x16xi32>
    %11 = arith.addi %10, %9 : vector<16x16xi32>
    %c16_i32_5 = arith.constant 16 : i32
    %12 = arith.muli %arg1, %c16_i32_5 : i32
    %13 = tpu.iota {dimensions = array<i32: 1>} : vector<16x16xi32>
    %14 = vector.broadcast %12 : i32 to vector<16x16xi32>
    %15 = arith.addi %14, %13 : vector<16x16xi32>
    %16 = arith.cmpi ne, %11, %15 : vector<16x16xi32>
    %c0_6 = arith.constant 0 : index
    %c0_7 = arith.constant 0 : index
    %17 = vector.load %arg2[%c0_6, %c0_7] : memref<16x1xi32, #tpu.memory_space<vmem>>, vector<16x1xi32>
    %c0_8 = arith.constant 0 : index
    %c0_9 = arith.constant 0 : index
    %18 = vector.load %arg3[%c0_8, %c0_9] : memref<1x16xi32, #tpu.memory_space<vmem>>, vector<1x16xi32>
    %19 = vector.broadcast %17 : vector<16x1xi32> to vector<16x16xi32>
    %20 = vector.broadcast %18 : vector<1x16xi32> to vector<16x16xi32>
    %21 = arith.cmpi eq, %19, %20 : vector<16x16xi32>
    %22 = arith.andi %21, %16 : vector<16x16xi1>
    %23 = arith.extui %22 : vector<16x16xi1> to vector<16x16xi32>
    %24 = arith.sitofp %23 : vector<16x16xi32> to vector<16x16xf32>
    %c0_10 = arith.constant 0 : index
    %c0_11 = arith.constant 0 : index
    %25 = vector.load %arg7[%c0_10, %c0_11] : memref<16x1xf32, #tpu.memory_space<vmem>>, vector<16x1xf32>
    %cst_12 = arith.constant dense<0xFF800000> : vector<16xf32>
    %26 = vector.multi_reduction <maximumf>, %7, %cst_12 [1] : vector<16x16xf32> to vector<16xf32>
    %27 = vector.shape_cast %26 : vector<16xf32> to vector<16x1xf32>
    %28 = arith.maximumf %25, %27 : vector<16x1xf32>
    %29 = arith.subf %25, %28 : vector<16x1xf32>
    %30 = math.exp %29 : vector<16x1xf32>
    %31 = vector.broadcast %28 : vector<16x1xf32> to vector<16x16xf32>
    %32 = arith.subf %7, %31 : vector<16x16xf32>
    %33 = math.exp %32 : vector<16x16xf32>
    %cst_13 = arith.constant 0.000000e+00 : f32
    %34 = vector.broadcast %cst_13 : f32 to vector<16x16xf32>
    %35 = arith.select %16, %33, %34 : vector<16x16xi1>, vector<16x16xf32>
    %c0_14 = arith.constant 0 : index
    %c0_15 = arith.constant 0 : index
    %36 = vector.load %arg8[%c0_14, %c0_15] : memref<16x1xf32, #tpu.memory_space<vmem>>, vector<16x1xf32>
    %37 = arith.mulf %30, %36 : vector<16x1xf32>
    %cst_16 = arith.constant dense<0.000000e+00> : vector<16xf32>
    %38 = vector.multi_reduction <add>, %35, %cst_16 [1] : vector<16x16xf32> to vector<16xf32>
    %39 = vector.shape_cast %38 : vector<16xf32> to vector<16x1xf32>
    %40 = arith.addf %37, %39 : vector<16x1xf32>
    %c0_17 = arith.constant 0 : index
    %c0_18 = arith.constant 0 : index
    %41 = vector.load %arg8[%c0_17, %c0_18] : memref<16x1xf32, #tpu.memory_space<vmem>>, vector<16x1xf32>
    tpu.vector_store %arg8[%c0_17, %c0_18], %40 {strides = array<i32>} : memref<16x1xf32, #tpu.memory_space<vmem>>, vector<16x1xf32>,
    %c0_19 = arith.constant 0 : index
    %c0_20 = arith.constant 0 : index
    %42 = vector.load %arg7[%c0_19, %c0_20] : memref<16x1xf32, #tpu.memory_space<vmem>>, vector<16x1xf32>
    tpu.vector_store %arg7[%c0_19, %c0_20], %28 {strides = array<i32>} : memref<16x1xf32, #tpu.memory_space<vmem>>, vector<16x1xf32>,
    %c0_21 = arith.constant 0 : index
    %c0_22 = arith.constant 0 : index
    %43 = vector.load %arg9[%c0_21, %c0_22] : memref<16x1xf32, #tpu.memory_space<vmem>>, vector<16x1xf32>
    %44 = arith.mulf %24, %7 : vector<16x16xf32>
    %cst_23 = arith.constant dense<0.000000e+00> : vector<16xf32>
    %45 = vector.multi_reduction <add>, %44, %cst_23 [1] : vector<16x16xf32> to vector<16xf32>
    %46 = vector.shape_cast %45 : vector<16xf32> to vector<16x1xf32>
    %47 = arith.addf %43, %46 : vector<16x1xf32>
    %c0_24 = arith.constant 0 : index
    %c0_25 = arith.constant 0 : index
    %48 = vector.load %arg9[%c0_24, %c0_25] : memref<16x1xf32, #tpu.memory_space<vmem>>, vector<16x1xf32>
    tpu.vector_store %arg9[%c0_24, %c0_25], %47 {strides = array<i32>} : memref<16x1xf32, #tpu.memory_space<vmem>>, vector<16x1xf32>,
    %c0_26 = arith.constant 0 : index
    %c0_27 = arith.constant 0 : index
    %49 = vector.load %arg10[%c0_26, %c0_27] : memref<16x1xf32, #tpu.memory_space<vmem>>, vector<16x1xf32>
    %cst_28 = arith.constant dense<0.000000e+00> : vector<16xf32>
    %50 = vector.multi_reduction <add>, %24, %cst_28 [1] : vector<16x16xf32> to vector<16xf32>
    %51 = vector.shape_cast %50 : vector<16xf32> to vector<16x1xf32>
    %52 = arith.addf %49, %51 : vector<16x1xf32>
    %c0_29 = arith.constant 0 : index
    %c0_30 = arith.constant 0 : index
    %53 = vector.load %arg10[%c0_29, %c0_30] : memref<16x1xf32, #tpu.memory_space<vmem>>, vector<16x1xf32>
    tpu.vector_store %arg10[%c0_29, %c0_30], %52 {strides = array<i32>} : memref<16x1xf32, #tpu.memory_space<vmem>>, vector<16x1xf32>,
    %c0_i32_31 = arith.constant 0 : i32
    %54 = arith.cmpi eq, %arg1, %c0_i32_31 : i32
    %55 = arith.extui %54 : i1 to i32
    %c0_i32_32 = arith.constant 0 : i32
    %56 = arith.cmpi ne, %55, %c0_i32_32 : i32
    scf.if %56 {
      %c0_33 = arith.constant 0 : index
      %c0_34 = arith.constant 0 : index
      %57 = vector.load %arg7[%c0_33, %c0_34] : memref<16x1xf32, #tpu.memory_space<vmem>>, vector<16x1xf32>
      %c0_35 = arith.constant 0 : index
      %c0_36 = arith.constant 0 : index
      %58 = vector.load %arg8[%c0_35, %c0_36] : memref<16x1xf32, #tpu.memory_space<vmem>>, vector<16x1xf32>
      %59 = math.log %58 : vector<16x1xf32>
      %60 = arith.addf %57, %59 : vector<16x1xf32>
      %c0_37 = arith.constant 0 : index
      %c0_38 = arith.constant 0 : index
      %61 = vector.load %arg9[%c0_37, %c0_38] : memref<16x1xf32, #tpu.memory_space<vmem>>, vector<16x1xf32>
      %c0_39 = arith.constant 0 : index
      %c0_40 = arith.constant 0 : index
      %62 = vector.load %arg10[%c0_39, %c0_40] : memref<16x1xf32, #tpu.memory_space<vmem>>, vector<16x1xf32>
      %63 = arith.mulf %62, %60 : vector<16x1xf32>
      %64 = arith.subf %61, %63 : vector<16x1xf32>
      %c0_41 = arith.constant 0 : index
      %c0_42 = arith.constant 0 : index
      %65 = vector.load %arg10[%c0_41, %c0_42] : memref<16x1xf32, #tpu.memory_space<vmem>>, vector<16x1xf32>
      %66 = arith.divf %64, %65 : vector<16x1xf32>
      %cst_43 = arith.constant -1.000000e+00 : f32
      %67 = vector.broadcast %cst_43 : f32 to vector<16x1xf32>
      %68 = arith.mulf %67, %66 : vector<16x1xf32>
      %c0_44 = arith.constant 0 : index
      %c0_45 = arith.constant 0 : index
      %69 = vector.load %arg6[%c0_44, %c0_45] : memref<16x1xf32, #tpu.memory_space<vmem>>, vector<16x1xf32>
      tpu.vector_store %arg6[%c0_44, %c0_45], %68 {strides = array<i32>} : memref<16x1xf32, #tpu.memory_space<vmem>>, vector<16x1xf32>,
    } else {
    }
    return
  }
  func.func @transform_0(%arg0: i32, %arg1: i32) -> (i32, i32) {
    %c0_i32 = arith.constant 0 : i32
    %c0_i32_0 = arith.constant 0 : i32
    return %arg0, %c0_i32 : i32, i32
  }
  func.func @transform_1(%arg0: i32, %arg1: i32) -> (i32, i32) {
    %c0_i32 = arith.constant 0 : i32
    %c0_i32_0 = arith.constant 0 : i32
    return %c0_i32, %arg1 : i32, i32
  }
  func.func @transform_2(%arg0: i32, %arg1: i32) -> (i32, i32) {
    %c0_i32 = arith.constant 0 : i32
    %c0_i32_0 = arith.constant 0 : i32
    return %arg0, %c0_i32 : i32, i32
  }
  func.func @transform_3(%arg0: i32, %arg1: i32) -> (i32, i32) {
    %c0_i32 = arith.constant 0 : i32
    %c0_i32_0 = arith.constant 0 : i32
    return %c0_i32, %arg1 : i32, i32
  }
  func.func @transform_4(%arg0: i32, %arg1: i32) -> (i32, i32) {
    %c0_i32 = arith.constant 0 : i32
    %c0_i32_0 = arith.constant 0 : i32
    return %arg0, %c0_i32 : i32, i32
  }
}

</mosaic_0001>

<llo_original>
// kernel: tpu_custom_call.1
$region0: #{tpu_custom_call.1}
  #allocation0 [shape = 'u32[]', space=smem, size = 0x4, offset = 0x4, fixed_abs, tag = 'smem constant byte address 0x4 - core index']
  #allocation1 [shape = 'u32[144,128]{1,0:T(1,128)}', space=vmem, size = 0x12000, scoped, tag = 'internal scratch']
  #allocation2 [shape = 'f32[16,1]{1,0:T(8,128)}', space=vmem, size = 0x2000, scoped, tag = 'scratch operand']
  #allocation3 [shape = 'f32[16,1]{1,0:T(8,128)}', space=vmem, size = 0x2000, scoped, tag = 'scratch operand']
  #allocation4 [shape = 'f32[16,1]{1,0:T(8,128)}', space=vmem, size = 0x2000, scoped, tag = 'scratch operand']
  #allocation5 [shape = 'f32[16,1]{1,0:T(8,128)}', space=vmem, size = 0x2000, scoped, tag = 'scratch operand']
  %s0 = inlined_call_operand.vmem [shape: s32[16,1], index: 0, kind: input, shape index: {}]
  %s1 = inlined_call_operand.vmem [shape: s32[1,16], index: 1, kind: input, shape index: {}]
  %s2 = inlined_call_operand.vmem [shape: f32[16,128], index: 2, kind: input, shape index: {}]
  %s3 = inlined_call_operand.vmem [shape: f32[128,16], index: 3, kind: input, shape index: {}]
  %s4 = inlined_call_operand.vmem [shape: f32[16,1], index: 4, kind: output, shape index: {}]
  %s5 = sld [smem:[#allocation0]]
  $region34: #{tpu_custom_call.1} parent=0
    _
  %s7 = ssub.s32 1, %s5
  %s8 = scalar_select 0, %s7, %s5
  // Predicated region
  $region2: #{tpu_custom_call.1} parent=0 // pred_check
    _
  $region3: #{tpu_custom_call.1} parent=0 // pred_check_branch
    %10 = sbr.rel (0) target = $region5
  $region4: #{tpu_custom_call.1} parent=0 // pred_region
    _
  $region5: #{tpu_custom_call.1} parent=0 // pred_fallthru
    _
  // Predicated region
  $region6: #{tpu_custom_call.1} parent=0 // pred_check
    _
  $region7: #{tpu_custom_call.1} parent=0 // pred_check_branch
    %12 = sbr.rel (0) target = $region9
  $region8: #{tpu_custom_call.1} parent=0 // pred_region
    _
  $region9: #{tpu_custom_call.1} parent=0 // pred_fallthru
    _
  // Predicated region
  $region10: #{tpu_custom_call.1} parent=0 // pred_check
    _
  $region11: #{tpu_custom_call.1} parent=0 // pred_check_branch
    %14 = sbr.rel (0) target = $region13
  $region12: #{tpu_custom_call.1} parent=0 // pred_region
    _
  $region13: #{tpu_custom_call.1} parent=0 // pred_fallthru
    _
  // Predicated region
  $region14: #{tpu_custom_call.1} parent=0 // pred_check
    _
  $region15: #{tpu_custom_call.1} parent=0 // pred_check_branch
    %16 = sbr.rel (0) target = $region17
  $region16: #{tpu_custom_call.1} parent=0 // pred_region
    _
  $region17: #{tpu_custom_call.1} parent=0 // pred_fallthru
    _
  %p17 = scmp.eq.s32.totalorder 0, 0
  // Predicated region
  $region18: #{tpu_custom_call.1} parent=0 // pred_check
    %p18 = pneg %p17
  $region19: #{tpu_custom_call.1} parent=0 // pred_check_branch
    %20 = sbr.rel (%p18) target = $region21
  $region20: #{tpu_custom_call.1} parent=0 // pred_region
    %vm21 = vcmask 7168
    %22 = vst.msk [vmem:[#allocation2] sm:$0xff] %vm21, -1e+30
    %23 = vst.msk [vmem:[#allocation2 + $0x8] sm:$0xff] %vm21, -1e+30
    %24 = vst.msk [vmem:[#allocation3] sm:$0xff] %vm21, 0.0
    %25 = vst.msk [vmem:[#allocation3 + $0x8] sm:$0xff] %vm21, 0.0
    %26 = vst.msk [vmem:[#allocation4] sm:$0xff] %vm21, 0.0
    %27 = vst.msk [vmem:[#allocation4 + $0x8] sm:$0xff] %vm21, 0.0
    %28 = vst.msk [vmem:[#allocation5] sm:$0xff] %vm21, 0.0
    %29 = vst.msk [vmem:[#allocation5 + $0x8] sm:$0xff] %vm21, 0.0
  $region21: #{tpu_custom_call.1} parent=0 // pred_fallthru
    _
  %v30 = vld [vmem:[%s2] sm:$0xff]
  %v31 = vld [vmem:[%s2 + $0x8] sm:$0xff]
  %v32 = vmul.f32 %v30, 14.285714
  %v33 = vmul.f32 %v31, 14.285714
  %v34 = vld [vmem:[%s3] sm:$0xff]
  %v35 = vld [vmem:[%s3 + $0x8] sm:$0xff]
  %v36 = vld [vmem:[%s3 + $0x10] sm:$0xff]
  %v37 = vld [vmem:[%s3 + $0x18] sm:$0xff]
  %v38 = vld [vmem:[%s3 + $0x20] sm:$0xff]
  %v39 = vld [vmem:[%s3 + $0x28] sm:$0xff]
  %v40 = vld [vmem:[%s3 + $0x30] sm:$0xff]
  %v41 = vld [vmem:[%s3 + $0x38] sm:$0xff]
  %v42 = vld [vmem:[%s3 + $0x40] sm:$0xff]
  %v43 = vld [vmem:[%s3 + $0x48] sm:$0xff]
  %v44 = vld [vmem:[%s3 + $0x50] sm:$0xff]
  %v45 = vld [vmem:[%s3 + $0x58] sm:$0xff]
  %v46 = vld [vmem:[%s3 + $0x60] sm:$0xff]
  %v47 = vld [vmem:[%s3 + $0x68] sm:$0xff]
  %v48 = vld [vmem:[%s3 + $0x70] sm:$0xff]
  %v49 = vld [vmem:[%s3 + $0x78] sm:$0xff]
  %50 = vmatprep.subr.mxu0 0.0
  %51 = vmatpush1.msra.mxu0 %v34
  %52 = vmatprep.subr.mxu0 0.0
  %53 = vmatpush1.msra.mxu0 %v35
  %54 = vmatprep.subr.mxu0 0.0
  %55 = vmatpush1.msra.mxu0 %v36
  %56 = vmatprep.subr.mxu0 0.0
  %57 = vmatpush1.msra.mxu0 %v37
  %58 = vmatprep.subr.mxu0 0.0
  %59 = vmatpush1.msra.mxu0 %v38
  %60 = vmatprep.subr.mxu0 0.0
  %61 = vmatpush1.msra.mxu0 %v39
  %62 = vmatprep.subr.mxu0 0.0
  %63 = vmatpush1.msra.mxu0 %v40
  %64 = vmatprep.subr.mxu0 0.0
  %65 = vmatpush1.msra.mxu0 %v41
  %66 = vmatprep.subr.mxu0 0.0
  %67 = vmatpush1.msra.mxu0 %v42
  %68 = vmatprep.subr.mxu0 0.0
  %69 = vmatpush1.msra.mxu0 %v43
  %70 = vmatprep.subr.mxu0 0.0
  %71 = vmatpush1.msra.mxu0 %v44
  %72 = vmatprep.subr.mxu0 0.0
  %73 = vmatpush1.msra.mxu0 %v45
  %74 = vmatprep.subr.mxu0 0.0
  %75 = vmatpush1.msra.mxu0 %v46
  %76 = vmatprep.subr.mxu0 0.0
  %77 = vmatpush1.msra.mxu0 %v47
  %78 = vmatprep.subr.mxu0 0.0
  %79 = vmatpush1.msra.mxu0 %v48
  %80 = vmatprep.subr.mxu0 0.0
  %81 = vmatpush1.msra.mxu0 %v49
  %82 = vmatprep.subr.mxu0 0.0
  %83 = vmatpush1.msra.mxu0 0.0
  %84 = vmatprep.subr.mxu0 0.0
  %85 = vmatpush1.msra.mxu0 0.0
  %86 = vmatprep.subr.mxu0 0.0
  %87 = vmatpush1.msra.mxu0 0.0
  %88 = vmatprep.subr.mxu0 0.0
  %89 = vmatpush1.msra.mxu0 0.0
  %90 = vmatprep.subr.mxu0 0.0
  %91 = vmatpush1.msra.mxu0 0.0
  %92 = vmatprep.subr.mxu0 0.0
  %93 = vmatpush1.msra.mxu0 0.0
  %94 = vmatprep.subr.mxu0 0.0
  %95 = vmatpush1.msra.mxu0 0.0
  %96 = vmatprep.subr.mxu0 0.0
  %97 = vmatpush1.msra.mxu0 0.0
  %98 = vmatprep.subr.mxu0 0.0
  %99 = vmatpush1.msra.mxu0 0.0
  %100 = vmatprep.subr.mxu0 0.0
  %101 = vmatpush1.msra.mxu0 0.0
  %102 = vmatprep.subr.mxu0 0.0
  %103 = vmatpush1.msra.mxu0 0.0
  %104 = vmatprep.subr.mxu0 0.0
  %105 = vmatpush1.msra.mxu0 0.0
  %106 = vmatprep.subr.mxu0 0.0
  %107 = vmatpush1.msra.mxu0 0.0
  %108 = vmatprep.subr.mxu0 0.0
  %109 = vmatpush1.msra.mxu0 0.0
  %110 = vmatprep.subr.mxu0 0.0
  %111 = vmatpush1.msra.mxu0 0.0
  %112 = vmatprep.subr.mxu0 0.0
  %113 = vmatpush1.msra.mxu0 0.0
  %114 = vmatprep.mubr.f32.mxu0 0.0
  %115 = vmatmul.mubr.f32.gmra.mrb[0].mxu0 %v32
  %v116 = vpop.f32.mrb[0].mxu0
  %v117 = vadd.f32 0.0, %v116
  %v118 = vpop.f32.mrb[0].mxu0
  %119 = vmatprep.mubr.f32.mxu0 0.0
  %120 = vmatmul.mubr.f32.gmra.mrb[0].mxu0 %v33
  %v121 = vpop.f32.mrb[0].mxu0
  %v122 = vadd.f32 0.0, %v121
  %v123 = vpop.f32.mrb[0].mxu0
  %124 = vdwg.mxu0
  %s125 = smul.u32 0, 16
  %v126 = vlaneseq
  %v127 = vshrl.u32 %v126, 7
  %v128 = vadd.s32 %v127, 8
  %v129 = vstv %s125
  %v130 = vadd.s32 %v129, %v127
  %v131 = vadd.s32 %v129, %v128
  %s132 = smul.u32 0, 16
  %v133 = vlaneseq
  %v134 = vand.u32 %v133, 127
  %v135 = vstv %s132
  %v136 = vadd.s32 %v135, %v134
  %vm137 = vcmp.ne.s32.totalorder %v130, %v136
  %vm138 = vcmp.ne.s32.totalorder %v131, %v136
  %v139 = vld [vmem:[%s0] sm:$0xff]
  %v140 = vld [vmem:[%s0 + $0x8] sm:$0xff]
  %v141 = vld [vmem:[%s1] sm:$0x1]
  %142 = vset.pattern.permute.xlu0 0
  %143 = vperm.xlu0 %142, %v139
  %v144 = vpop.permute.xlu0 %143
  %145 = vset.pattern.permute.xlu0 0
  %146 = vperm.xlu0 %145, %v140
  %v147 = vpop.permute.xlu0 %146
  %v148 = vlaneseq
  %v149 = vshrl.u32 %v148, 7
  %v150 = vsub.s32 0, %v149
  %v151 = vrot.slane %v141, %v150
  %vm152 = vcmp.eq.s32.totalorder %v144, %v151
  %vm153 = vcmp.eq.s32.totalorder %v147, %v151
  %vm154 = vmand %vm152, %vm137
  %vm155 = vmand %vm153, %vm138
  %v156 = vsel %vm154, 1, 0
  %v157 = vsel %vm155, 1, 0
  %v158 = vcvt.s32.f32 %v156
  %v159 = vcvt.s32.f32 %v157
  %v160 = vld [vmem:[#allocation2] sm:$0xff]
  %v161 = vld [vmem:[#allocation2 + $0x8] sm:$0xff]
  %vm162 = vcmask 130048
  %v163 = vsel %vm162, %v117, -inf
  %164 = vmax.xlane.f32.xlu0 %v163
  %v165 = vpop.xlane.xlu0 %164
  %v166 = vsel %vm162, %v122, -inf
  %167 = vmax.xlane.f32.xlu0 %v166
  %v168 = vpop.xlane.xlu0 %167
  %v169 = vmax.f32 %v160, %v165
  %v170 = vmax.f32 %v161, %v168
  %v171 = vsub.f32 %v160, %v169
  %v172 = vsub.f32 %v161, %v170
  %v173 = vmul.f32 %v171, 1.442695
  %v174 = vpow.pop %v173
  %v175 = vmul.f32 %v172, 1.442695
  %v176 = vpow.pop %v175
  %178 = vset.pattern.permute.xlu0 0
  %179 = vperm.xlu0 %178, %v169
  %v180 = vpop.permute.xlu0 %179
  %183 = vset.pattern.permute.xlu0 0
  %184 = vperm.xlu0 %183, %v170
  %v185 = vpop.permute.xlu0 %184
  %v187 = vsub.f32 %v117, %v180
  %v188 = vsub.f32 %v122, %v185
  %v189 = vmul.f32 %v187, 1.442695
  %v190 = vpow.pop %v189
  %v191 = vmul.f32 %v188, 1.442695
  %v192 = vpow.pop %v191
  %v193 = vsel %vm137, %v190, 0.0
  %v194 = vsel %vm138, %v192, 0.0
  %v195 = vld [vmem:[#allocation3] sm:$0xff]
  %v196 = vld [vmem:[#allocation3 + $0x8] sm:$0xff]
  %v197 = vmul.f32 %v174, %v195
  %v198 = vmul.f32 %v176, %v196
  %v199 = vsel %vm162, %v193, 0.0
  %200 = vadd.xlane.f32.xlu0 %v199
  %v201 = vpop.xlane.xlu0 %200
  %v202 = vsel %vm162, %v194, 0.0
  %203 = vadd.xlane.f32.xlu0 %v202
  %v204 = vpop.xlane.xlu0 %203
  %v205 = vadd.f32 %v197, %v201
  %v206 = vadd.f32 %v198, %v204
  %vm207 = vcmask 7168
  %208 = vst.msk [vmem:[#allocation3] sm:$0xff] %vm207, %v205
  %209 = vst.msk [vmem:[#allocation3 + $0x8] sm:$0xff] %vm207, %v206
  %210 = vst.msk [vmem:[#allocation2] sm:$0xff] %vm207, %v169
  %211 = vst.msk [vmem:[#allocation2 + $0x8] sm:$0xff] %vm207, %v170
  %v212 = vld [vmem:[#allocation4] sm:$0xff]
  %v213 = vld [vmem:[#allocation4 + $0x8] sm:$0xff]
  %v214 = vmul.f32 %v158, %v117
  %v215 = vmul.f32 %v159, %v122
  %v216 = vsel %vm162, %v214, 0.0
  %217 = vadd.xlane.f32.xlu0 %v216
  %v218 = vpop.xlane.xlu0 %217
  %v219 = vsel %vm162, %v215, 0.0
  %220 = vadd.xlane.f32.xlu0 %v219
  %v221 = vpop.xlane.xlu0 %220
  %v222 = vadd.f32 %v212, %v218
  %v223 = vadd.f32 %v213, %v221
  %224 = vst.msk [vmem:[#allocation4] sm:$0xff] %vm207, %v222
  %225 = vst.msk [vmem:[#allocation4 + $0x8] sm:$0xff] %vm207, %v223
  %v226 = vld [vmem:[#allocation5] sm:$0xff]
  %v227 = vld [vmem:[#allocation5 + $0x8] sm:$0xff]
  %v228 = vsel %vm162, %v158, 0.0
  %229 = vadd.xlane.f32.xlu0 %v228
  %v230 = vpop.xlane.xlu0 %229
  %v231 = vsel %vm162, %v159, 0.0
  %232 = vadd.xlane.f32.xlu0 %v231
  %v233 = vpop.xlane.xlu0 %232
  %v234 = vadd.f32 %v226, %v230
  %v235 = vadd.f32 %v227, %v233
  %236 = vst.msk [vmem:[#allocation5] sm:$0xff] %vm207, %v234
  %237 = vst.msk [vmem:[#allocation5 + $0x8] sm:$0xff] %vm207, %v235
  // Predicated region
  $region22: #{tpu_custom_call.1} parent=0 // pred_check
    %p238 = pneg %p17
  $region23: #{tpu_custom_call.1} parent=0 // pred_check_branch
    %240 = sbr.rel (%p238) target = $region25
  $region24: #{tpu_custom_call.1} parent=0 // pred_region
    %v241 = vld [vmem:[#allocation2] sm:$0xff]
    %v242 = vld [vmem:[#allocation2 + $0x8] sm:$0xff]
    %v243 = vld [vmem:[#allocation3] sm:$0xff]
    %v244 = vld [vmem:[#allocation3 + $0x8] sm:$0xff]
    %v245 = vlog2.pop %v243
    %v246 = vmul.f32 %v245, 0.6931472
    %v247 = vlog2.pop %v244
    %v248 = vmul.f32 %v247, 0.6931472
    %v249 = vadd.f32 %v241, %v246
    %v250 = vadd.f32 %v242, %v248
    %v251 = vld [vmem:[#allocation4] sm:$0xff]
    %v252 = vld [vmem:[#allocation4 + $0x8] sm:$0xff]
    %v253 = vld [vmem:[#allocation5] sm:$0xff]
    %v254 = vld [vmem:[#allocation5 + $0x8] sm:$0xff]
    %v255 = vmul.f32 %v253, %v249
    %v256 = vmul.f32 %v254, %v250
    %v257 = vsub.f32 %v251, %v255
    %v258 = vsub.f32 %v252, %v256
    %v259 = vrcp.pop %v253
    %v260 = vmul.f32 %v257, %v259
    %v261 = vrcp.pop %v254
    %v262 = vmul.f32 %v258, %v261
    %v263 = vmul.f32 %v260, -1.0
    %v264 = vmul.f32 %v262, -1.0
    %265 = vst.msk [vmem:[%s4] sm:$0xff] %vm207, %v263
    %266 = vst.msk [vmem:[%s4 + $0x8] sm:$0xff] %vm207, %v264
  $region25: #{tpu_custom_call.1} parent=0 // pred_fallthru
    _
  // Predicated region
  $region26: #{tpu_custom_call.1} parent=0 // pred_check
    _
  $region27: #{tpu_custom_call.1} parent=0 // pred_check_branch
    %268 = sbr.rel (0) target = $region29
  $region28: #{tpu_custom_call.1} parent=0 // pred_region
    _
  $region29: #{tpu_custom_call.1} parent=0 // pred_fallthru
    _
  // Predicated region
  $region30: #{tpu_custom_call.1} parent=0 // pred_check
    _
  $region31: #{tpu_custom_call.1} parent=0 // pred_check_branch
    %270 = sbr.rel (0) target = $region33
  $region32: #{tpu_custom_call.1} parent=0 // pred_region
    _
  $region33: #{tpu_custom_call.1} parent=0 // pred_fallthru
    _

</llo_original>
